<compile_context>
chip_gen: v7x
topology: tpu7x:2x2x1
jax: 0.10.0
libtpu: 0.0.40
codegen_flags: <defaults>
</compile_context>

<pallas_src>
import functools

import jax
import jax.numpy as jnp
from jax import lax
from jax.experimental import pallas as pl
from jax.experimental.pallas import tpu as pltpu


# ----------------------------- hardware queries -------------------------------


@functools.lru_cache(maxsize=1)
def _tpu_vmem_capacity():
    # NOTE: cached per process; if first trace happens on a non-TPU host the
    # conservative fallback is baked in (perf-only).
    try:
        return int(pltpu.get_tpu_info().vmem_capacity_bytes)
    except Exception:
        return 64 << 20          # conservative (v7x physical VMEM)


@functools.lru_cache(maxsize=1)
def _num_tensorcores():
    """Best-effort TensorCore count (2 on v7x-style chips, 1 on v5e/v6e)."""
    try:
        info = pltpu.get_tpu_info()
        for attr in ("num_cores", "core_count", "num_tensorcores"):
            v = getattr(info, attr, None)
            if v:
                return max(1, int(v))
    except Exception:
        pass
    try:
        v = getattr(jax.devices()[0], "num_cores", None)
        if v:
            return max(1, int(v))
    except Exception:
        pass
    return 1


def _scoped_vmem_limit():
    return int(min(_tpu_vmem_capacity() // 2, 32 << 20))


# ----------------------------- layout helpers ---------------------------------


def _round_up(x, m):
    return ((x + m - 1) // m) * m


def _choose_layout(numel):
    """Lane-dense (rows, lanes) flatten; free reshape (no pad) when possible."""
    for lanes in (512, 256, 128):
        if numel % lanes == 0 and numel // lanes >= 8:
            return lanes, numel // lanes, False
    lanes = 128
    rows = _round_up(max(1, int(pl.cdiv(numel, lanes))), 8)
    return lanes, rows, True


def _as_rows(x, rows, lanes, needs_pad):
    flat = jnp.asarray(x).reshape(-1)
    if needs_pad:
        flat = jnp.pad(flat, (0, rows * lanes - flat.shape[0]))
    return flat.reshape(rows, lanes)


def _pick_tile_rows(rows, lanes, stream_itemsizes):
    """Row tile from a VMEM byte budget; ~2 MiB blocks per stream, mult. of 8."""
    cap = _tpu_vmem_capacity()
    budget = max(2 << 20, min(cap // 4, 16 << 20))
    bytes_per_row = 2 * lanes * sum(stream_itemsizes)        # x2 = double buffering
    tr_budget = budget // max(1, bytes_per_row)
    tr_block = (2 << 20) // (lanes * max(stream_itemsizes))  # ~2 MiB per stream block
    tr = min(tr_budget, tr_block)
    tr = max(8, (tr // 8) * 8)
    tr = min(tr, max(8, (rows // 8) * 8))                    # block never exceeds array
    return int(tr)


# ----------------------------- kernels -----------------------------------------


def _mse_none_kernel(lw_ref, pred_ref, target_ref, out_ref):
    lw = lw_ref[0]
    d = pred_ref[...].astype(jnp.float32) - target_ref[...].astype(jnp.float32)
    out_ref[...] = (d * d * lw).astype(out_ref.dtype)


def _mse_none_weighted_kernel(lw_ref, pred_ref, target_ref, w_ref, out_ref):
    lw = lw_ref[0]
    d = pred_ref[...].astype(jnp.float32) - target_ref[...].astype(jnp.float32)
    out_ref[...] = (d * d * w_ref[...].astype(jnp.float32) * lw).astype(out_ref.dtype)


def _make_sum_kernel(rows, tr, bps, weighted, ragged):
    """Accumulate sq-diff tiles into a resident (1, 8, lanes) f32 block."""

    def kernel(*refs):
        if weighted:
            pred_ref, target_ref, w_ref, out_ref = refs
        else:
            pred_ref, target_ref, out_ref = refs

        @pl.when(pl.program_id(1) == 0)
        def _():
            out_ref[...] = jnp.zeros_like(out_ref)

        d = pred_ref[...].astype(jnp.float32) - target_ref[...].astype(jnp.float32)
        sq = d * d
        if weighted:
            sq = sq * w_ref[...].astype(jnp.float32)
        if ragged:
            # Mask rows of the last (partial) tile: OOB reads are unspecified.
            blk = pl.program_id(0) * bps + pl.program_id(1)
            row_idx = blk * tr + lax.broadcasted_iota(jnp.int32, (tr, 1), 0)
            sq = jnp.where(row_idx < rows, sq, 0.0)
        lanes = sq.shape[1]
        # Fold (tr, lanes) onto the (8, lanes) accumulator: pure VPU adds.
        out_ref[...] += sq.reshape(tr // 8, 8, lanes).sum(axis=0)[None]

    return kernel


# ----------------------------- pallas calls -------------------------------------


def _elementwise_call(pred2, target2, weight2, loss_weight, out_dtype, rows, lanes):
    out_itemsize = jnp.dtype(out_dtype).itemsize
    itemsizes = [pred2.dtype.itemsize, target2.dtype.itemsize, out_itemsize]
    if weight2 is not None:
        itemsizes.append(weight2.dtype.itemsize)

    tr = _pick_tile_rows(rows, lanes, itemsizes)
    cores = _num_tensorcores()
    if cores > 1:
        # Give every TensorCore at least one block.
        tr = min(tr, max(8, _round_up(int(pl.cdiv(rows, cores)), 8)))
    nblk = int(pl.cdiv(rows, tr))

    lw = jnp.asarray(loss_weight, jnp.float32).reshape(1)    # SMEM scalar, no recompile
    tile_spec = pl.BlockSpec((tr, lanes), lambda i: (i, 0))
    smem_spec = pl.BlockSpec(memory_space=pltpu.MemorySpace.SMEM)

    if weight2 is None:
        kern, args = _mse_none_kernel, (lw, pred2, target2)
        in_specs = [smem_spec, tile_spec, tile_spec]
    else:
        kern, args = _mse_none_weighted_kernel, (lw, pred2, target2, weight2)
        in_specs = [smem_spec, tile_spec, tile_spec, tile_spec]

    return pl.pallas_call(
        kern,
        out_shape=jax.ShapeDtypeStruct((rows, lanes), out_dtype),
        grid_spec=pltpu.PrefetchScalarGridSpec(
            num_scalar_prefetch=0,
            grid=(nblk,),
            in_specs=in_specs,
            out_specs=tile_spec,
        ),
        compiler_params=pltpu.CompilerParams(
            dimension_semantics=("parallel",),
            vmem_limit_bytes=_scoped_vmem_limit(),
        ),
        cost_estimate=pl.CostEstimate(
            flops=3 * rows * lanes,
            transcendentals=0,
            bytes_accessed=rows * lanes * sum(itemsizes),
        ),
    )(*args)


def _sum_call(pred2, target2, weight2, rows, lanes):
    itemsizes = [pred2.dtype.itemsize, target2.dtype.itemsize]
    if weight2 is not None:
        itemsizes.append(weight2.dtype.itemsize)

    tr = _pick_tile_rows(rows, lanes, itemsizes)
    total_blocks = int(pl.cdiv(rows, tr))
    cores = _num_tensorcores()
    # Split contiguous block ranges across TensorCores only when it divides
    # evenly (avoids fully out-of-bounds blocks); 1 on single-TC chips.
    nsplits = cores if (cores > 1 and total_blocks % cores == 0) else 1
    bps = total_blocks // nsplits
    ragged = (rows % tr) != 0

    kern = _make_sum_kernel(rows, tr, bps, weight2 is not None, ragged)
    tile_spec = pl.BlockSpec((tr, lanes), lambda i, j: (i * bps + j, 0))
    out_spec = pl.BlockSpec((1, 8, lanes), lambda i, j: (i, 0, 0))

    args = (pred2, target2) if weight2 is None else (pred2, target2, weight2)
    in_specs = [tile_spec] * len(args)

    partials = pl.pallas_call(
        kern,
        out_shape=jax.ShapeDtypeStruct((nsplits, 8, lanes), jnp.float32),
        grid_spec=pltpu.PrefetchScalarGridSpec(
            num_scalar_prefetch=0,
            grid=(nsplits, bps),
            in_specs=in_specs,
            out_specs=out_spec,
        ),
        compiler_params=pltpu.CompilerParams(
            dimension_semantics=("parallel", "arbitrary"),
            vmem_limit_bytes=_scoped_vmem_limit(),
        ),
        cost_estimate=pl.CostEstimate(
            flops=3 * rows * lanes,
            transcendentals=0,
            bytes_accessed=rows * lanes * sum(itemsizes) + nsplits * 8 * lanes * 4,
        ),
    )(*args)
    # Tiny (nsplits, 8, lanes) finishing reduction outside the kernel.
    return jnp.sum(partials)


# ----------------------------- module wrapper -----------------------------------


def mse_loss_pallas(pred, target, weight=None, avg_factor=None,
                    reduction='mean', loss_weight=1.0):
    """Forward pass of mogen MSELoss using Pallas TPU kernels."""
    assert reduction in (None, 'none', 'mean', 'sum')
    reduction = 'none' if reduction is None else reduction

    pred = jnp.asarray(pred)
    target = jnp.asarray(target)
    orig_shape = pred.shape
    orig_dtype = pred.dtype
    numel = int(pred.size)

    if weight is not None:
        weight = jnp.asarray(weight)
        if tuple(weight.shape) != tuple(orig_shape):
            # TODO(synk): broadcast small (per-channel / per-sample) weights inside
            # the kernel instead of materializing a full-size copy in HBM.
            weight = jnp.broadcast_to(weight, orig_shape)

    lanes, rows, needs_pad = _choose_layout(numel)
    pred2 = _as_rows(pred, rows, lanes, needs_pad)
    target2 = _as_rows(target, rows, lanes, needs_pad)
    weight2 = _as_rows(weight, rows, lanes, needs_pad) if weight is not None else None

    if reduction == 'none':
        if avg_factor is not None:
            raise ValueError('avg_factor can not be used with reduction="none"')
        out = _elementwise_call(pred2, target2, weight2, loss_weight,
                                orig_dtype, rows, lanes)
        if needs_pad:
            out = out.reshape(-1)[:numel]
        return out.reshape(orig_shape)

    total = _sum_call(pred2, target2, weight2, rows, lanes)   # f32 scalar
    if reduction == 'mean':
        denom = (jnp.asarray(numel, jnp.float32) if avg_factor is None
                 else jnp.asarray(avg_factor, jnp.float32))
        total = total / denom
    else:  # 'sum'
        if avg_factor is not None:
            raise ValueError('avg_factor can not be used with reduction="sum"')
    return (jnp.asarray(loss_weight, jnp.float32) * total).astype(orig_dtype)


# ----------------------------- demo / check -------------------------------------

if __name__ == "__main__":
    key = jax.random.PRNGKey(0)
    k1, k2, k3 = jax.random.split(key, 3)

    # --- main small NCHW-like case (numel divides lanes -> zero-copy layout) ---
    shape = (2, 4, 16, 16)
    pred = jax.random.normal(k1, shape, jnp.float32)
    target = jax.random.normal(k2, shape, jnp.float32)
    weight = jax.random.uniform(k3, shape, jnp.float32)

    loss_mean = mse_loss_pallas(pred, target, reduction='mean', loss_weight=1.0)
    loss_sum_w = mse_loss_pallas(pred, target, weight=weight,
                                 reduction='sum', loss_weight=0.5)
    loss_none = mse_loss_pallas(pred, target, weight=weight,
                                reduction='none', loss_weight=2.0)
    loss_af = mse_loss_pallas(pred, target, weight=weight,
                              reduction='mean', avg_factor=100.0, loss_weight=1.0)

    # bf16 path: native 16-bit streaming, f32 in-kernel accumulation.
    pred_bf = pred.astype(jnp.bfloat16)
    target_bf = target.astype(jnp.bfloat16)
    loss_bf = mse_loss_pallas(pred_bf, target_bf, reduction='mean', loss_weight=1.0)

    # --- ragged-tail case (rows not a multiple of the tile rows, no padding) ---
    kr1, kr2 = jax.random.split(jax.random.PRNGKey(1))
    rshape = (2, 625, 512)
    rpred = jax.random.normal(kr1, rshape, jnp.float32)
    rtarget = jax.random.normal(kr2, rshape, jnp.float32)
    rloss_mean = mse_loss_pallas(rpred, rtarget, reduction='mean')
    rloss_none = mse_loss_pallas(rpred, rtarget, reduction='none')

    # --- fallback pad path (numel not divisible by 128) ---
    kf1, kf2 = jax.random.split(jax.random.PRNGKey(2))
    fshape = (2, 3, 7, 9)
    fpred = jax.random.normal(kf1, fshape, jnp.float32)
    ftarget = jax.random.normal(kf2, fshape, jnp.float32)
    floss_sum = mse_loss_pallas(fpred, ftarget, reduction='sum')
    floss_none = mse_loss_pallas(fpred, ftarget, reduction='none')

    jax.block_until_ready((loss_mean, loss_sum_w, loss_none, loss_af, loss_bf,
                           rloss_mean, rloss_none, floss_sum, floss_none))

    # Pure-JAX references (mirror torch weighted_loss semantics).
    sq = (pred - target) ** 2
    assert loss_none.shape == shape and loss_none.dtype == pred.dtype
    assert jnp.allclose(loss_mean, sq.mean(), rtol=1e-5, atol=1e-5)
    assert jnp.allclose(loss_sum_w, 0.5 * (sq * weight).sum(), rtol=1e-5, atol=1e-3)
    assert jnp.allclose(loss_none, 2.0 * sq * weight, rtol=1e-5, atol=1e-5)
    assert jnp.allclose(loss_af, (sq * weight).sum() / 100.0, rtol=1e-5, atol=1e-4)

    sq_bf = (pred_bf.astype(jnp.float32) - target_bf.astype(jnp.float32)) ** 2
    assert loss_bf.dtype == jnp.bfloat16
    assert jnp.allclose(loss_bf.astype(jnp.float32), sq_bf.mean(), rtol=3e-2, atol=3e-2)

    rsq = (rpred - rtarget) ** 2
    assert jnp.allclose(rloss_mean, rsq.mean(), rtol=1e-5, atol=1e-5)
    assert jnp.allclose(rloss_none, rsq, rtol=1e-5, atol=1e-5)

    fsq = (fpred - ftarget) ** 2
    assert jnp.allclose(floss_sum, fsq.sum(), rtol=1e-5, atol=1e-4)
    assert jnp.allclose(floss_none, fsq, rtol=1e-5, atol=1e-5)

    print("KERNEL_OK")
</pallas_src>

<mosaic_0001>
module attributes {stable_mosaic.version = 11 : i64} {
  func.func @kernel(%arg0: i32, %arg1: i32, %arg2: memref<8x256xf32, #tpu.memory_space<vmem>>, %arg3: memref<8x256xf32, #tpu.memory_space<vmem>>, %arg4: memref<1x8x256xf32, #tpu.memory_space<vmem>>) attributes {dimension_semantics = [#tpu.dimension_semantics<parallel>, #tpu.dimension_semantics<arbitrary>], iteration_bounds = array<i64: 1, 1>, scalar_prefetch = 0 : i64, scratch_operands = 0 : i64, tpu.core_type = #tpu.core_type<tc>, window_params = [{transform_indices = @transform_0, window_bounds = array<i64: 8, 256>}, {transform_indices = @transform_1, window_bounds = array<i64: 8, 256>}, {transform_indices = @transform_2, window_bounds = array<i64: 1, 8, 256>}]} {
    %c0_i32 = arith.constant 0 : i32
    %0 = arith.cmpi eq, %arg1, %c0_i32 : i32
    %1 = arith.extui %0 : i1 to i32
    %c0_i32_0 = arith.constant 0 : i32
    %2 = arith.cmpi ne, %1, %c0_i32_0 : i32
    scf.if %2 {
      %cst_10 = arith.constant 0.000000e+00 : f32
      %13 = vector.broadcast %cst_10 : f32 to vector<1x8x256xf32>
      %c0_11 = arith.constant 0 : index
      %c0_12 = arith.constant 0 : index
      %c0_13 = arith.constant 0 : index
      %14 = vector.load %arg4[%c0_11, %c0_12, %c0_13] : memref<1x8x256xf32, #tpu.memory_space<vmem>>, vector<1x8x256xf32>
      tpu.vector_store %arg4[%c0_11, %c0_12, %c0_13], %13 {strides = array<i32>} : memref<1x8x256xf32, #tpu.memory_space<vmem>>, vector<1x8x256xf32>,
    } else {
    }
    %c0 = arith.constant 0 : index
    %c0_1 = arith.constant 0 : index
    %3 = vector.load %arg2[%c0, %c0_1] : memref<8x256xf32, #tpu.memory_space<vmem>>, vector<8x256xf32>
    %c0_2 = arith.constant 0 : index
    %c0_3 = arith.constant 0 : index
    %4 = vector.load %arg3[%c0_2, %c0_3] : memref<8x256xf32, #tpu.memory_space<vmem>>, vector<8x256xf32>
    %5 = arith.subf %3, %4 : vector<8x256xf32>
    %6 = arith.mulf %5, %5 : vector<8x256xf32>
    %c0_4 = arith.constant 0 : index
    %c0_5 = arith.constant 0 : index
    %c0_6 = arith.constant 0 : index
    %7 = vector.load %arg4[%c0_4, %c0_5, %c0_6] : memref<1x8x256xf32, #tpu.memory_space<vmem>>, vector<1x8x256xf32>
    %8 = vector.shape_cast %6 : vector<8x256xf32> to vector<1x8x256xf32>
    %cst = arith.constant dense<0.000000e+00> : vector<8x256xf32>
    %9 = vector.multi_reduction <add>, %8, %cst [0] : vector<1x8x256xf32> to vector<8x256xf32>
    %10 = vector.shape_cast %9 : vector<8x256xf32> to vector<1x8x256xf32>
    %11 = arith.addf %7, %10 : vector<1x8x256xf32>
    %c0_7 = arith.constant 0 : index
    %c0_8 = arith.constant 0 : index
    %c0_9 = arith.constant 0 : index
    %12 = vector.load %arg4[%c0_7, %c0_8, %c0_9] : memref<1x8x256xf32, #tpu.memory_space<vmem>>, vector<1x8x256xf32>
    tpu.vector_store %arg4[%c0_7, %c0_8, %c0_9], %11 {strides = array<i32>} : memref<1x8x256xf32, #tpu.memory_space<vmem>>, vector<1x8x256xf32>,
    return
  }
  func.func @transform_0(%arg0: i32, %arg1: i32) -> (i32, i32) {
    %c1_i32 = arith.constant 1 : i32
    %0 = arith.muli %arg0, %c1_i32 : i32
    %1 = arith.addi %0, %arg1 : i32
    %c0_i32 = arith.constant 0 : i32
    %c0_i32_0 = arith.constant 0 : i32
    return %1, %c0_i32 : i32, i32
  }
  func.func @transform_1(%arg0: i32, %arg1: i32) -> (i32, i32) {
    %c1_i32 = arith.constant 1 : i32
    %0 = arith.muli %arg0, %c1_i32 : i32
    %1 = arith.addi %0, %arg1 : i32
    %c0_i32 = arith.constant 0 : i32
    %c0_i32_0 = arith.constant 0 : i32
    return %1, %c0_i32 : i32, i32
  }
  func.func @transform_2(%arg0: i32, %arg1: i32) -> (i32, i32, i32) {
    %c0_i32 = arith.constant 0 : i32
    %c0_i32_0 = arith.constant 0 : i32
    %c0_i32_1 = arith.constant 0 : i32
    return %arg0, %c0_i32, %c0_i32_0 : i32, i32, i32
  }
}

</mosaic_0001>

<llo_original>
// kernel: tpu_custom_call.1
$region0: #{tpu_custom_call.1}
  #allocation0 [shape = 'u32[]', space=smem, size = 0x4, offset = 0x4, fixed_abs, tag = 'smem constant byte address 0x4 - core index']
  #allocation1 [shape = 'u32[144,128]{1,0:T(1,128)}', space=vmem, size = 0x12000, scoped, tag = 'internal scratch']
  %s0 = inlined_call_operand.hbm [shape: f32[8,256], index: 0, kind: input, shape index: {}]
  %s1 = inlined_call_operand.hbm [shape: f32[8,256], index: 1, kind: input, shape index: {}]
  %s2 = inlined_call_operand.hbm [shape: f32[1,8,256], index: 2, kind: output, shape index: {}]
  %s3 = sld [smem:[#allocation0]]
  $region30: #{tpu_custom_call.1} parent=0
    _
  %s5 = ssub.s32 1, %s3
  %s6 = scalar_select 0, %s5, %s3
  $region1: #{tpu_custom_call.1} parent=0
    #allocation2 [shape = 'u8[8192]{0}', space=vmem, size = 0x2000, scoped, tag = 'input window, operand 0, single buffered']
    #allocation3 [shape = 's32[1]{0}', space=sflag, size = 0x4, scoped, tag = 'scoped memory for tpu_custom_call.1']
    #allocation4 [shape = 's32[1]{0}', space=sflag, size = 0x4, scoped, tag = 'scoped memory for tpu_custom_call.1']
    #allocation5 [shape = 'u8[8192]{0}', space=vmem, size = 0x2000, scoped, tag = 'input window, operand 1, single buffered']
    #allocation6 [shape = 's32[1]{0}', space=sflag, size = 0x4, scoped, tag = 'scoped memory for tpu_custom_call.1']
    #allocation7 [shape = 'u8[8192]{0}', space=vmem, size = 0x2000, scoped, tag = 'output window, operand 0, single buffered']
    %7 = vsyncpa [#allocation3], 0
    %8 = vsyncpa [#allocation6], 0
    %9 = vsyncpa [#allocation4], 0
    // Predicated region
    $region2: #{tpu_custom_call.1} parent=1 // pred_check
      _
    $region3: #{tpu_custom_call.1} parent=1 // pred_check_branch
      %11 = sbr.rel (0) target = $region5
    $region4: #{tpu_custom_call.1} parent=1 // pred_region
      %s12 = sadd.s32 0, 0
      %s14 = ssub.s32 256, 256
      %15 = vsyncadd [#allocation3], %s14
      %s16 = smul.addr %s12, 2
      %s17 = smul.addr %s16, 128
      %s18 = scalar_lea.hbm %s0, %s17
      %s20 = sshll.u32 [#allocation2], 4
      %s21 = int_to_ptr.vmem [resolvable:$true] %s20
      %23 = dma.hbm_to_vmem [thread:$0]  %s18, 256, %s21, [#allocation3]
    $region5: #{tpu_custom_call.1} parent=1 // pred_fallthru
      _
    // Predicated region
    $region6: #{tpu_custom_call.1} parent=1 // pred_check
      _
    $region7: #{tpu_custom_call.1} parent=1 // pred_check_branch
      %25 = sbr.rel (0) target = $region9
    $region8: #{tpu_custom_call.1} parent=1 // pred_region
      %s26 = sadd.s32 0, 0
      %s28 = ssub.s32 256, 256
      %29 = vsyncadd [#allocation6], %s28
      %s30 = smul.addr %s26, 2
      %s31 = smul.addr %s30, 128
      %s32 = scalar_lea.hbm %s1, %s31
      %s34 = sshll.u32 [#allocation5], 4
      %s35 = int_to_ptr.vmem [resolvable:$true] %s34
      %37 = dma.hbm_to_vmem [thread:$0]  %s32, 256, %s35, [#allocation6]
    $region9: #{tpu_custom_call.1} parent=1 // pred_fallthru
      _
    // Predicated region
    $region10: #{tpu_custom_call.1} parent=1 // pred_check
      _
    $region11: #{tpu_custom_call.1} parent=1 // pred_check_branch
      %39 = sbr.rel (0) target = $region13
    $region12: #{tpu_custom_call.1} parent=1 // pred_region
      %40 = dma.done [#allocation3], 256
    $region13: #{tpu_custom_call.1} parent=1 // pred_fallthru
      _
    // Predicated region
    $region14: #{tpu_custom_call.1} parent=1 // pred_check
      _
    $region15: #{tpu_custom_call.1} parent=1 // pred_check_branch
      %42 = sbr.rel (0) target = $region17
    $region16: #{tpu_custom_call.1} parent=1 // pred_region
      %43 = dma.done [#allocation6], 256
    $region17: #{tpu_custom_call.1} parent=1 // pred_fallthru
      _
    %s44 = sadd.s32 0, 0
    %s45 = sadd.s32 0, 0
    %p46 = scmp.eq.s32.totalorder 0, 0
    // Predicated region
    $region18: #{tpu_custom_call.1} parent=1 // pred_check
      %p47 = pneg %p46
    $region19: #{tpu_custom_call.1} parent=1 // pred_check_branch
      %49 = sbr.rel (%p47) target = $region21
    $region20: #{tpu_custom_call.1} parent=1 // pred_region
      %50 = vst [vmem:[#allocation7] sm:$0xff] 0.0
      %51 = vst [vmem:[#allocation7 + $0x8] sm:$0xff] 0.0
    $region21: #{tpu_custom_call.1} parent=1 // pred_fallthru
      _
    %v52 = vld [vmem:[#allocation2] sm:$0xff]
    %v53 = vld [vmem:[#allocation2 + $0x8] sm:$0xff]
    %v54 = vld [vmem:[#allocation5] sm:$0xff]
    %v55 = vld [vmem:[#allocation5 + $0x8] sm:$0xff]
    %v56 = vsub.f32 %v52, %v54
    %v57 = vsub.f32 %v53, %v55
    %v58 = vmul.f32 %v56, %v56
    %v59 = vmul.f32 %v57, %v57
    %v60 = vld [vmem:[#allocation7] sm:$0xff]
    %v61 = vld [vmem:[#allocation7 + $0x8] sm:$0xff]
    %v62 = vadd.f32 %v58, 0.0
    %v63 = vadd.f32 %v59, 0.0
    %v64 = vadd.f32 %v60, %v62
    %v65 = vadd.f32 %v61, %v63
    %66 = vst [vmem:[#allocation7] sm:$0xff] %v64
    %67 = vst [vmem:[#allocation7 + $0x8] sm:$0xff] %v65
    // Predicated region
    $region22: #{tpu_custom_call.1} parent=1 // pred_check
      _
    $region23: #{tpu_custom_call.1} parent=1 // pred_check_branch
      %69 = sbr.rel (0) target = $region25
    $region24: #{tpu_custom_call.1} parent=1 // pred_region
      %s71 = ssub.s32 256, 256
      %72 = vsyncadd [#allocation4], %s71
      %s74 = sshll.u32 [#allocation7], 4
      %s75 = int_to_ptr.vmem [resolvable:$true] %s74
      %77 = dma.vmem_to_hbm [thread:$0]  %s75, 256, %s2, [#allocation4]
    $region25: #{tpu_custom_call.1} parent=1 // pred_fallthru
      _
    // Predicated region
    $region26: #{tpu_custom_call.1} parent=1 // pred_check
      _
    $region27: #{tpu_custom_call.1} parent=1 // pred_check_branch
      %79 = sbr.rel (0) target = $region29
    $region28: #{tpu_custom_call.1} parent=1 // pred_region
      %80 = dma.done [#allocation4], 256
    $region29: #{tpu_custom_call.1} parent=1 // pred_fallthru
      _
    %81 = vsyncpa [#allocation3], 1
    %82 = vsyncpa [#allocation6], 1
    %83 = vsyncpa [#allocation4], 1

</llo_original>
